<compile_context>
chip_gen: v5e
topology: v5e:2x2
jax: 0.10.0
libtpu: 0.0.40
codegen_flags: <defaults>
</compile_context>

<pallas_src>
import jax
import jax.numpy as jnp
from jax import lax
from jax.experimental import pallas as pl
from jax.experimental.pallas import tpu as pltpu

# ---- synthetic config (stands in for CFG_DICT['DATASET']) -------------------
NUM_ITEMS = 64            # CFG_DICT['DATASET']['NUM_ITEMS']
NUM_GENRES = 18           # CFG_DICT['DATASET']['NUM_GENRES']
EMB_SIZE = 32
ITEM_DIM = EMB_SIZE * 5                       # 160
YEAR_OFF = ITEM_DIM                           # year cols 160..191
GENRE_OFF = ITEM_DIM + EMB_SIZE               # genre cols 192..223
REP_DIM = EMB_SIZE * 5 + EMB_SIZE * 2         # 224  == rep_dim in the PyTorch module

DATA_COLS = 2 + NUM_GENRES                    # 20  (item_idx | year_idx | genres)
GENRE_K = 24                                  # data slab padded to a multiple of 8
K_EMB = 2 * NUM_ITEMS                         # 128: item one-hot | year one-hot

MAX_BATCH_BLOCK = 2048                        # per-step batch tile (VMEM-safe on all gens)


def _round_up(x, m):
    return (x + m - 1) // m * m


def _choose_tiling(B):
    """Pick (tb, b_pad, n_steps): >=2 (even) steps when B allows, padding < 8*steps."""
    n_steps = pl.cdiv(B, MAX_BATCH_BLOCK)
    if B >= 16 and n_steps == 1:
        n_steps = 2                      # v7x: keep both TensorCores busy
    if n_steps > 1 and n_steps % 2 == 1:
        n_steps += 1                     # even step count balances the 2 TCs
    tb = _round_up(pl.cdiv(B, n_steps), 8)
    b_pad = n_steps * tb
    return tb, b_pad, n_steps


def item_rep_kernel(slab_ref, w_emb_ref, w_data_ref, out_ref):
    """slab_ref: (tb, GENRE_K) f32; w_emb: (K_EMB, REP_DIM); w_data: (GENRE_K, REP_DIM)."""
    tb = slab_ref.shape[0]
    slab = slab_ref[...]                                     # (tb, GENRE_K)

    # Index columns -> int32 (exact for small integer-valued floats).
    item_idx = slab[:, 0:1].astype(jnp.int32)                # (tb, 1)
    year_idx = slab[:, 1:2].astype(jnp.int32)                # (tb, 1)

    # One-hot activation built purely from iota compares (VPU only, no concat).
    iota = lax.broadcasted_iota(jnp.int32, (tb, K_EMB), 1)
    onehot = ((iota == item_idx) |
              (iota == year_idx + NUM_ITEMS)).astype(jnp.float32)   # (tb, K_EMB)

    # Embedding lookups (+ folded genre bias) on the MXU.
    acc = jnp.dot(onehot, w_emb_ref[...], preferred_element_type=jnp.float32)
    # Genre Linear: raw slab (idx lanes hit zero rows) @ W^T block.
    acc = acc + jnp.dot(slab, w_data_ref[...], preferred_element_type=jnp.float32)

    out_ref[...] = acc.astype(out_ref.dtype)                 # (tb, REP_DIM) store


def build_fused_params(item_table, year_table, w_t, b):
    """Fused weights: w_emb (K_EMB, REP_DIM), w_data (GENRE_K, REP_DIM)."""
    w_emb = jnp.zeros((K_EMB, REP_DIM), jnp.float32)
    w_emb = w_emb.at[0:NUM_ITEMS, 0:ITEM_DIM].set(item_table)
    w_emb = w_emb.at[NUM_ITEMS:2 * NUM_ITEMS, YEAR_OFF:GENRE_OFF].set(year_table)
    # Fold genre bias into every item row's genre columns (exactly one fires per sample).
    w_emb = w_emb.at[0:NUM_ITEMS, GENRE_OFF:REP_DIM].add(
        jnp.broadcast_to(b[None, :], (NUM_ITEMS, EMB_SIZE)))

    w_data = jnp.zeros((GENRE_K, REP_DIM), jnp.float32)      # rows 0,1 & 20..23 stay zero
    w_data = w_data.at[2:2 + NUM_GENRES, GENRE_OFF:REP_DIM].set(w_t)
    return w_emb, w_data


def item_rep_forward(data, w_emb, w_data, out_dtype=jnp.float32):
    """data: (B, S, 2+NUM_GENRES) float32 -> (B, REP_DIM) out_dtype."""
    B = data.shape[0]
    tb, b_pad, n_steps = _choose_tiling(B)

    # Slab data[:, 0, :], lane-padded 20->24 and row-padded B->b_pad in one pad.
    # TODO(synk): could be folded into a 3-D BlockSpec, but the slab copy is tiny
    # (24 f32/row) relative to the 224-wide output writeback.
    slab = jnp.pad(data[:, 0, :],
                   ((0, b_pad - B), (0, GENRE_K - DATA_COLS)))

    out = pl.pallas_call(
        item_rep_kernel,
        out_shape=jax.ShapeDtypeStruct((b_pad, REP_DIM), out_dtype),
        grid_spec=pltpu.PrefetchScalarGridSpec(
            num_scalar_prefetch=0,
            grid=(n_steps,),
            in_specs=[
                pl.BlockSpec((tb, GENRE_K), lambda i: (i, 0)),        # data slab (batch-blocked)
                pl.BlockSpec((K_EMB, REP_DIM), lambda i: (0, 0)),     # fused emb table (invariant)
                pl.BlockSpec((GENRE_K, REP_DIM), lambda i: (0, 0)),   # genre weights (invariant)
            ],
            out_specs=pl.BlockSpec((tb, REP_DIM), lambda i: (i, 0)),
        ),
        compiler_params=pltpu.CompilerParams(
            dimension_semantics=("parallel",)),
    )(slab, w_emb, w_data)

    if b_pad != B:            # no-op (and no XLA slice pass) whenever B == b_pad
        out = out[:B]
    return out


def item_rep_reference(data, item_table, year_table, w_t, b):
    """Pure-JAX reference mirroring the PyTorch forward (float32)."""
    item_idx = data[:, 0, 0].astype(jnp.int32)
    year_idx = data[:, 0, 1].astype(jnp.int32)
    genres = data[:, 0, 2:].astype(jnp.float32)
    return jnp.concatenate([item_table[item_idx],
                            year_table[year_idx],
                            genres @ w_t + b[None, :]], axis=1)


def _make_inputs(key, B, S):
    k_idx, k_yidx, k_gen = jax.random.split(key, 3)
    item_idx = jax.random.randint(k_idx, (B,), 0, NUM_ITEMS).astype(jnp.float32)
    year_idx = jax.random.randint(k_yidx, (B,), 0, NUM_ITEMS).astype(jnp.float32)
    genres = (jax.random.uniform(k_gen, (B, S, NUM_GENRES)) < 0.3).astype(jnp.float32)
    return jnp.concatenate(
        [jnp.broadcast_to(item_idx[:, None, None], (B, S, 1)),
         jnp.broadcast_to(year_idx[:, None, None], (B, S, 1)),
         genres], axis=2)                                    # (B, S, 2 + NUM_GENRES)


if __name__ == "__main__":
    key = jax.random.PRNGKey(0)
    k_item, k_year, k_w, k_b, k_d0, k_d1 = jax.random.split(key, 6)

    # --- deterministic parameter init (shapes per __init__) ------------------
    item_table = 0.1 * jax.random.normal(k_item, (NUM_ITEMS, ITEM_DIM), jnp.float32)
    item_table = item_table.at[0].set(0.0)            # padding_idx=0
    year_table = 0.1 * jax.random.normal(k_year, (NUM_ITEMS, EMB_SIZE), jnp.float32)
    bound = 1.0 / jnp.sqrt(NUM_GENRES)
    w = jax.random.uniform(k_w, (EMB_SIZE, NUM_GENRES), jnp.float32, -bound, bound)
    b = jax.random.uniform(k_b, (EMB_SIZE,), jnp.float32, -bound, bound)
    w_t = w.T                                          # (NUM_GENRES, EMB_SIZE)

    # TODO(synk): PyTorch runs genre_linear in float64; TPU Pallas has no native f64
    # path, so the genre projection (and the output) is float32.
    w_emb, w_data = build_fused_params(item_table, year_table, w_t, b)

    fwd = jax.jit(item_rep_forward)

    # --- small example: B=8 (single grid step, no padding, no output slice) --
    B, S = 8, 4
    data = _make_inputs(k_d0, B, S)
    out = jax.block_until_ready(fwd(data, w_emb, w_data))
    assert out.shape == (B, REP_DIM), out.shape
    ref = item_rep_reference(data, item_table, year_table, w_t, b)
    assert jnp.allclose(out, ref, atol=1e-5, rtol=1e-5), \
        float(jnp.max(jnp.abs(out - ref)))

    # --- second check: B=40 exercises the 2-step grid + ragged-batch padding -
    B2 = 40
    data2 = _make_inputs(k_d1, B2, S)
    out2 = jax.block_until_ready(fwd(data2, w_emb, w_data))
    ref2 = item_rep_reference(data2, item_table, year_table, w_t, b)
    assert out2.shape == (B2, REP_DIM), out2.shape
    assert jnp.allclose(out2, ref2, atol=1e-5, rtol=1e-5), \
        float(jnp.max(jnp.abs(out2 - ref2)))

    print("KERNEL_OK")
</pallas_src>

<mosaic_0001>
module attributes {stable_mosaic.version = 11 : i64} {
  func.func @item_rep_kernel(%arg0: i32, %arg1: memref<8x24xf32, #tpu.memory_space<vmem>>, %arg2: memref<128x224xf32, #tpu.memory_space<vmem>>, %arg3: memref<24x224xf32, #tpu.memory_space<vmem>>, %arg4: memref<8x224xf32, #tpu.memory_space<vmem>>) attributes {dimension_semantics = [#tpu.dimension_semantics<parallel>], iteration_bounds = array<i64: 1>, scalar_prefetch = 0 : i64, scratch_operands = 0 : i64, tpu.core_type = #tpu.core_type<tc>, window_params = [{transform_indices = @transform_0, window_bounds = array<i64: 8, 24>}, {pipeline_mode = #tpu.pipeline_mode<synchronous>, transform_indices = @transform_1, window_bounds = array<i64: 128, 224>}, {pipeline_mode = #tpu.pipeline_mode<synchronous>, transform_indices = @transform_2, window_bounds = array<i64: 24, 224>}, {transform_indices = @transform_3, window_bounds = array<i64: 8, 224>}]} {
    %c0 = arith.constant 0 : index
    %c0_0 = arith.constant 0 : index
    %0 = vector.load %arg1[%c0, %c0_0] : memref<8x24xf32, #tpu.memory_space<vmem>>, vector<8x24xf32>
    %1 = vector.extract_strided_slice %0 {offsets = [0, 0], sizes = [8, 1], strides = [1, 1]} : vector<8x24xf32> to vector<8x1xf32>
    %2 = arith.fptosi %1 : vector<8x1xf32> to vector<8x1xi32>
    %3 = vector.extract_strided_slice %0 {offsets = [0, 1], sizes = [8, 1], strides = [1, 1]} : vector<8x24xf32> to vector<8x1xf32>
    %4 = arith.fptosi %3 : vector<8x1xf32> to vector<8x1xi32>
    %5 = tpu.iota {dimensions = array<i32: 1>} : vector<8x128xi32>
    %6 = vector.broadcast %2 : vector<8x1xi32> to vector<8x128xi32>
    %7 = arith.cmpi eq, %5, %6 : vector<8x128xi32>
    %c64_i32 = arith.constant 64 : i32
    %8 = vector.broadcast %c64_i32 : i32 to vector<8x1xi32>
    %9 = arith.addi %4, %8 : vector<8x1xi32>
    %10 = vector.broadcast %9 : vector<8x1xi32> to vector<8x128xi32>
    %11 = arith.cmpi eq, %5, %10 : vector<8x128xi32>
    %12 = arith.ori %7, %11 : vector<8x128xi1>
    %13 = arith.extui %12 : vector<8x128xi1> to vector<8x128xi32>
    %14 = arith.sitofp %13 : vector<8x128xi32> to vector<8x128xf32>
    %c0_1 = arith.constant 0 : index
    %c0_2 = arith.constant 0 : index
    %15 = vector.load %arg2[%c0_1, %c0_2] : memref<128x224xf32, #tpu.memory_space<vmem>>, vector<128x224xf32>
    %cst = arith.constant dense<0.000000e+00> : vector<8x224xf32>
    %16 = tpu.matmul %14, %15, %cst {dimension_numbers = #tpu.dot_dimension_numbers<[1], [0], [0], [1], [0, 0, 1, 1], [], []>} : vector<8x128xf32>, vector<128x224xf32>, vector<8x224xf32> -> vector<8x224xf32>
    %c0_3 = arith.constant 0 : index
    %c0_4 = arith.constant 0 : index
    %17 = vector.load %arg3[%c0_3, %c0_4] : memref<24x224xf32, #tpu.memory_space<vmem>>, vector<24x224xf32>
    %cst_5 = arith.constant dense<0.000000e+00> : vector<8x224xf32>
    %18 = tpu.matmul %0, %17, %cst_5 {dimension_numbers = #tpu.dot_dimension_numbers<[1], [0], [0], [1], [0, 0, 1, 1], [], []>} : vector<8x24xf32>, vector<24x224xf32>, vector<8x224xf32> -> vector<8x224xf32>
    %19 = arith.addf %16, %18 : vector<8x224xf32>
    %c0_6 = arith.constant 0 : index
    %c0_7 = arith.constant 0 : index
    %20 = vector.load %arg4[%c0_6, %c0_7] : memref<8x224xf32, #tpu.memory_space<vmem>>, vector<8x224xf32>
    tpu.vector_store %arg4[%c0_6, %c0_7], %19 {strides = array<i32>} : memref<8x224xf32, #tpu.memory_space<vmem>>, vector<8x224xf32>,
    return
  }
  func.func @transform_0(%arg0: i32) -> (i32, i32) {
    %c0_i32 = arith.constant 0 : i32
    %c0_i32_0 = arith.constant 0 : i32
    return %arg0, %c0_i32 : i32, i32
  }
  func.func @transform_1(%arg0: i32) -> (i32, i32) {
    %c0_i32 = arith.constant 0 : i32
    %c0_i32_0 = arith.constant 0 : i32
    %c0_i32_1 = arith.constant 0 : i32
    return %c0_i32, %c0_i32_0 : i32, i32
  }
  func.func @transform_2(%arg0: i32) -> (i32, i32) {
    %c0_i32 = arith.constant 0 : i32
    %c0_i32_0 = arith.constant 0 : i32
    %c0_i32_1 = arith.constant 0 : i32
    return %c0_i32, %c0_i32_0 : i32, i32
  }
  func.func @transform_3(%arg0: i32) -> (i32, i32) {
    %c0_i32 = arith.constant 0 : i32
    %c0_i32_0 = arith.constant 0 : i32
    return %arg0, %c0_i32 : i32, i32
  }
}

</mosaic_0001>

<llo_original>
// kernel: item_rep_forward.1
$region0: #{item_rep_forward.1}
  #allocation0 [shape = 'u32[]', space=smem, size = 0x4, offset = 0x4, fixed_abs, tag = 'smem constant byte address 0x4 - core index']
  #allocation1 [shape = 'u32[72,128]{1,0:T(1,128)}', space=vmem, size = 0x9000, scoped, tag = 'internal scratch']
  %s0 = inlined_call_operand.vmem [shape: f32[8,24], index: 0, kind: input, shape index: {}]
  %s1 = inlined_call_operand.vmem [shape: f32[128,224], index: 1, kind: input, shape index: {}]
  %s2 = inlined_call_operand.vmem [shape: f32[24,224], index: 2, kind: input, shape index: {}]
  %s3 = inlined_call_operand.hbm [shape: f32[8,224], index: 3, kind: output, shape index: {}]
  %s4 = sld [smem:[#allocation0]]
  $region22: #{item_rep_forward.1} parent=0
    _
  %s6 = ssub.s32 1, %s4
  %s7 = scalar_select 0, %s6, %s4
  $region1: #{item_rep_forward.1} parent=0
    #allocation2 [shape = 'u8[8192]{0}', space=vmem, size = 0x2000, scoped, tag = 'output window, operand 0, single buffered']
    #allocation3 [shape = 's32[1]{0}', space=sflag, size = 0x4, scoped, tag = 'scoped memory for item_rep_forward.1']
    %8 = vsyncpa [#allocation3], 0
    // Predicated region
    $region2: #{item_rep_forward.1} parent=1 // pred_check
      _
    $region3: #{item_rep_forward.1} parent=1 // pred_check_branch
      %10 = sbr.rel (0) target = $region5
    $region4: #{item_rep_forward.1} parent=1 // pred_region
      _
    $region5: #{item_rep_forward.1} parent=1 // pred_fallthru
      _
    // Predicated region
    $region6: #{item_rep_forward.1} parent=1 // pred_check
      _
    $region7: #{item_rep_forward.1} parent=1 // pred_check_branch
      %12 = sbr.rel (0) target = $region9
    $region8: #{item_rep_forward.1} parent=1 // pred_region
      _
    $region9: #{item_rep_forward.1} parent=1 // pred_fallthru
      _
    // Predicated region
    $region10: #{item_rep_forward.1} parent=1 // pred_check
      _
    $region11: #{item_rep_forward.1} parent=1 // pred_check_branch
      %14 = sbr.rel (0) target = $region13
    $region12: #{item_rep_forward.1} parent=1 // pred_region
      _
    $region13: #{item_rep_forward.1} parent=1 // pred_fallthru
      _
    %v15 = vld [vmem:[%s0] sm:$0xff]
    %v16 = vcvt.f32.s32.to.zero.pseudo %v15
    %v17 = vlaneseq
    %v18 = vand.u32 %v17, 127
    %19 = vset.pattern.permute.xlu0 0
    %20 = vperm.xlu0 %19, %v16
    %v21 = vpop.permute.xlu0 %20
    %vm22 = vcmp.eq.s32.totalorder %v18, %v21
    %v23 = vadd.s32 %v16, 64
    %24 = vset.pattern.permute.xlu0 1
    %25 = vperm.xlu0 %24, %v23
    %v26 = vpop.permute.xlu0 %25
    %vm27 = vcmp.eq.s32.totalorder %v18, %v26
    %vm28 = vmor %vm22, %vm27
    %v29 = vsel %vm28, 1, 0
    %v30 = vcvt.s32.f32 %v29
    %v31 = vld [vmem:[%s1] sm:$0xff]
    %v32 = vld [vmem:[%s1 + $0x8] sm:$0xff]
    %v33 = vld [vmem:[%s1 + $0x10] sm:$0xff]
    %v34 = vld [vmem:[%s1 + $0x18] sm:$0xff]
    %v35 = vld [vmem:[%s1 + $0x20] sm:$0xff]
    %v36 = vld [vmem:[%s1 + $0x28] sm:$0xff]
    %v37 = vld [vmem:[%s1 + $0x30] sm:$0xff]
    %v38 = vld [vmem:[%s1 + $0x38] sm:$0xff]
    %v39 = vld [vmem:[%s1 + $0x40] sm:$0xff]
    %v40 = vld [vmem:[%s1 + $0x48] sm:$0xff]
    %v41 = vld [vmem:[%s1 + $0x50] sm:$0xff]
    %v42 = vld [vmem:[%s1 + $0x58] sm:$0xff]
    %v43 = vld [vmem:[%s1 + $0x60] sm:$0xff]
    %v44 = vld [vmem:[%s1 + $0x68] sm:$0xff]
    %v45 = vld [vmem:[%s1 + $0x70] sm:$0xff]
    %v46 = vld [vmem:[%s1 + $0x78] sm:$0xff]
    %v47 = vld [vmem:[%s1 + $0x80] sm:$0xff]
    %v48 = vld [vmem:[%s1 + $0x88] sm:$0xff]
    %v49 = vld [vmem:[%s1 + $0x90] sm:$0xff]
    %v50 = vld [vmem:[%s1 + $0x98] sm:$0xff]
    %v51 = vld [vmem:[%s1 + $0xa0] sm:$0xff]
    %v52 = vld [vmem:[%s1 + $0xa8] sm:$0xff]
    %v53 = vld [vmem:[%s1 + $0xb0] sm:$0xff]
    %v54 = vld [vmem:[%s1 + $0xb8] sm:$0xff]
    %v55 = vld [vmem:[%s1 + $0xc0] sm:$0xff]
    %v56 = vld [vmem:[%s1 + $0xc8] sm:$0xff]
    %v57 = vld [vmem:[%s1 + $0xd0] sm:$0xff]
    %v58 = vld [vmem:[%s1 + $0xd8] sm:$0xff]
    %v59 = vld [vmem:[%s1 + $0xe0] sm:$0xff]
    %v60 = vld [vmem:[%s1 + $0xe8] sm:$0xff]
    %v61 = vld [vmem:[%s1 + $0xf0] sm:$0xff]
    %v62 = vld [vmem:[%s1 + $0xf8] sm:$0xff]
    %v63 = vld [vmem:[%s2] sm:$0xff]
    %v64 = vld [vmem:[%s2 + $0x8] sm:$0xff]
    %v65 = vld [vmem:[%s2 + $0x10] sm:$0xff]
    %v66 = vld [vmem:[%s2 + $0x18] sm:$0xff]
    %v67 = vld [vmem:[%s2 + $0x20] sm:$0xff]
    %v68 = vld [vmem:[%s2 + $0x28] sm:$0xff]
    %vm69 = vcmask 195584
    %v71 = vsel %vm69, %v15, 0
    %73 = vmatpush.msra.mxu0 0.0
    %74 = vmatpush.msra.mxu0 0.0
    %75 = vmatpush.msra.mxu0 0.0
    %76 = vmatpush.msra.mxu0 0.0
    %77 = vmatpush.msra.mxu0 0.0
    %78 = vmatpush.msra.mxu0 0.0
    %79 = vmatpush.msra.mxu0 0.0
    %80 = vmatpush.msra.mxu0 0.0
    %81 = vmatpush.msra.mxu0 0.0
    %82 = vmatpush.msra.mxu0 0.0
    %83 = vmatpush.msra.mxu0 0.0
    %84 = vmatpush.msra.mxu0 0.0
    %85 = vmatpush.msra.mxu0 0.0
    %86 = vmatpush.msra.mxu0 %v67
    %87 = vmatpush.msra.mxu0 %v65
    %88 = vmatpush.msra.mxu0 %v63
    %89 = vmatmul.f32.gmra.mxu0 %v71
    %v90 = vpop.f32.mrf.mxu0
    %v91 = vadd.f32 0.0, %v90
    %92 = vdwg.mxu0
    %93 = vmatpush.msra.mxu0 0.0
    %94 = vmatpush.msra.mxu0 0.0
    %95 = vmatpush.msra.mxu0 0.0
    %96 = vmatpush.msra.mxu0 0.0
    %97 = vmatpush.msra.mxu0 0.0
    %98 = vmatpush.msra.mxu0 0.0
    %99 = vmatpush.msra.mxu0 0.0
    %100 = vmatpush.msra.mxu0 0.0
    %101 = vmatpush.msra.mxu0 0.0
    %102 = vmatpush.msra.mxu0 0.0
    %103 = vmatpush.msra.mxu0 0.0
    %104 = vmatpush.msra.mxu0 0.0
    %105 = vmatpush.msra.mxu0 0.0
    %106 = vmatpush.msra.mxu0 %v68
    %107 = vmatpush.msra.mxu0 %v66
    %108 = vmatpush.msra.mxu0 %v64
    %109 = vmatmul.f32.gmra.mxu0 %v71
    %v110 = vpop.f32.mrf.mxu0
    %v111 = vadd.f32 0.0, %v110
    %112 = vdwg.mxu0
    %113 = vmatpush.msra.mxu0 %v61
    %114 = vmatpush.msra.mxu0 %v59
    %115 = vmatpush.msra.mxu0 %v57
    %116 = vmatpush.msra.mxu0 %v55
    %117 = vmatpush.msra.mxu0 %v53
    %118 = vmatpush.msra.mxu0 %v51
    %119 = vmatpush.msra.mxu0 %v49
    %120 = vmatpush.msra.mxu0 %v47
    %121 = vmatpush.msra.mxu0 %v45
    %122 = vmatpush.msra.mxu0 %v43
    %123 = vmatpush.msra.mxu0 %v41
    %124 = vmatpush.msra.mxu0 %v39
    %125 = vmatpush.msra.mxu0 %v37
    %126 = vmatpush.msra.mxu0 %v35
    %127 = vmatpush.msra.mxu0 %v33
    %128 = vmatpush.msra.mxu0 %v31
    %129 = vmatmul.f32.gmra.mxu0 %v30
    %v130 = vpop.f32.mrf.mxu0
    %v131 = vadd.f32 %v91, %v130
    %132 = vdwg.mxu0
    %133 = vmatpush.msra.mxu0 %v62
    %134 = vmatpush.msra.mxu0 %v60
    %135 = vmatpush.msra.mxu0 %v58
    %136 = vmatpush.msra.mxu0 %v56
    %137 = vmatpush.msra.mxu0 %v54
    %138 = vmatpush.msra.mxu0 %v52
    %139 = vmatpush.msra.mxu0 %v50
    %140 = vmatpush.msra.mxu0 %v48
    %141 = vmatpush.msra.mxu0 %v46
    %142 = vmatpush.msra.mxu0 %v44
    %143 = vmatpush.msra.mxu0 %v42
    %144 = vmatpush.msra.mxu0 %v40
    %145 = vmatpush.msra.mxu0 %v38
    %146 = vmatpush.msra.mxu0 %v36
    %147 = vmatpush.msra.mxu0 %v34
    %148 = vmatpush.msra.mxu0 %v32
    %149 = vmatmul.f32.gmra.mxu0 %v30
    %v150 = vpop.f32.mrf.mxu0
    %v151 = vadd.f32 %v111, %v150
    %152 = vdwg.mxu0
    %153 = vst [vmem:[#allocation2] sm:$0xff] %v131
    %vm154 = vcmask 785408
    %155 = vst.msk [vmem:[#allocation2 + $0x8] sm:$0xff] %vm154, %v151
    // Predicated region
    $region14: #{item_rep_forward.1} parent=1 // pred_check
      _
    $region15: #{item_rep_forward.1} parent=1 // pred_check_branch
      %157 = sbr.rel (0) target = $region17
    $region16: #{item_rep_forward.1} parent=1 // pred_region
      %159 = vsyncadd [#allocation3], 0
      %s161 = sshll.u32 [#allocation2], 4
      %s162 = int_to_ptr.vmem [resolvable:$true] %s161
      %s163 = sshll.u32 %s3, 4
      %s164 = int_to_ptr.hbm [resolvable:$true] %s163
      %166 = dma.vmem_to_hbm [thread:$0]  %s162, 256, %s164, [#allocation3]
    $region17: #{item_rep_forward.1} parent=1 // pred_fallthru
      _
    // Predicated region
    $region18: #{item_rep_forward.1} parent=1 // pred_check
      _
    $region19: #{item_rep_forward.1} parent=1 // pred_check_branch
      %168 = sbr.rel (0) target = $region21
    $region20: #{item_rep_forward.1} parent=1 // pred_region
      %170 = dma.done [#allocation3], 256
    $region21: #{item_rep_forward.1} parent=1 // pred_fallthru
      _
    %171 = vsyncpa [#allocation3], 1

</llo_original>
